<compile_context>
chip_gen: v7x
topology: tpu7x:2x2x1
jax: 0.10.0
libtpu: 0.0.40
codegen_flags: <defaults>
</compile_context>

<pallas_src>
import functools
import math

import jax
import jax.numpy as jnp
from jax.experimental import pallas as pl
from jax.experimental.pallas import tpu as pltpu


def _sinusoidal_pos_emb_kernel(t_ref, tab_ref, o_ref):
    """t_ref: (TB, 1) f32; tab_ref: (2, dim) f32 [freq row, phase row];
    o_ref: (TB, dim) out_dtype."""
    t = t_ref[...]                      # (TB, 1)
    freq = tab_ref[0:1, :]              # (1, dim) -- broadcast row
    phase = tab_ref[1:2, :]             # (1, dim) -- 0 for sin half, pi/2 for cos half
    arg = t * freq + phase              # (TB, dim) via broadcast
    o_ref[...] = jnp.sin(arg).astype(o_ref.dtype)   # single dense store


def sinusoidal_pos_emb(time, dim, *, out_dtype=jnp.float32, block_b=None):
    """Pallas equivalent of SinusoidalPosEmb(dim)(time).

    block_b: if given and B > block_b, tile the batch with a 1-D "parallel"
    grid (useful for very large B / v7x two-TC sharding); otherwise run as a
    single gridless block (best for the common small-B timestep case).
    """
    assert dim % 2 == 0, "dim must be even"
    assert dim >= 4, "dim must be >= 4 (half_dim - 1 would be zero otherwise)"
    half_dim = dim // 2
    log_scale = math.log(10000.0) / (half_dim - 1)

    # Hoisted (2, dim) table: row 0 = frequencies (repeated for both halves),
    # row 1 = phase (0 for the sin half, pi/2 for the cos half).
    k = jnp.arange(half_dim, dtype=jnp.float32)
    freq_half = jnp.exp(k * jnp.float32(-log_scale))
    freq_row = jnp.concatenate([freq_half, freq_half])
    phase_row = jnp.concatenate(
        [jnp.zeros((half_dim,), jnp.float32),
         jnp.full((half_dim,), math.pi / 2.0, jnp.float32)])
    table = jnp.stack([freq_row, phase_row], axis=0)          # (2, dim) f32

    t2 = jnp.asarray(time, jnp.float32).reshape(-1, 1)        # (B, 1)
    b = t2.shape[0]
    out_bytes = jnp.dtype(out_dtype).itemsize

    cost = pl.CostEstimate(
        flops=2 * b * dim,                 # one mul + one add per element
        transcendentals=b * dim,           # one sin per element
        bytes_accessed=b * dim * out_bytes + b * 4 + 2 * dim * 4)

    if block_b is None or b <= block_b:
        # Gridless: whole problem is one VMEM-resident block (full-array
        # blocks are exempt from the (8,128) divisibility rule).
        return pl.pallas_call(
            _sinusoidal_pos_emb_kernel,
            out_shape=jax.ShapeDtypeStruct((b, dim), out_dtype),
            in_specs=[pl.BlockSpec(memory_space=pltpu.MemorySpace.VMEM),
                      pl.BlockSpec(memory_space=pltpu.MemorySpace.VMEM)],
            out_specs=pl.BlockSpec(memory_space=pltpu.MemorySpace.VMEM),
            cost_estimate=cost,
        )(t2, table)

    # Large-B path: tile the batch; "parallel" axis shards across TCs (v7x)
    # and double-buffers the (TB, dim) writeback.
    tb = max(8, (block_b // 8) * 8)                            # sublane-aligned
    b_pad = pl.cdiv(b, tb) * tb
    if b_pad != b:
        t2 = jnp.pad(t2, ((0, b_pad - b), (0, 0)))
    out = pl.pallas_call(
        _sinusoidal_pos_emb_kernel,
        out_shape=jax.ShapeDtypeStruct((b_pad, dim), out_dtype),
        grid=(b_pad // tb,),
        in_specs=[pl.BlockSpec((tb, 1), lambda i: (i, 0)),
                  pl.BlockSpec((2, dim), lambda i: (0, 0))],
        out_specs=pl.BlockSpec((tb, dim), lambda i: (i, 0)),
        compiler_params=pltpu.CompilerParams(
            dimension_semantics=("parallel",)),
        cost_estimate=cost,
    )(t2, table)
    return out[:b]


# ---------------- pure-JAX reference for validation ----------------
def ref_sinusoidal_pos_emb(time, dim):
    half_dim = dim // 2
    scale = math.log(10000.0) / (half_dim - 1)
    freqs = jnp.exp(jnp.arange(half_dim, dtype=jnp.float32) * -scale)
    emb = jnp.asarray(time, jnp.float32)[:, None] * freqs[None, :]
    return jnp.concatenate([jnp.sin(emb), jnp.cos(emb)], axis=-1)


if __name__ == "__main__":
    key = jax.random.PRNGKey(0)

    # Gridless path: small diffusion-style batch, lane-dense output.
    B, DIM = 8, 128
    time = jax.random.randint(key, (B,), 0, 1000).astype(jnp.float32)

    out = jax.block_until_ready(sinusoidal_pos_emb(time, DIM))
    assert out.shape == (B, DIM), out.shape
    ref = jax.block_until_ready(ref_sinusoidal_pos_emb(time, DIM))
    assert jnp.allclose(out, ref, rtol=1e-3, atol=1e-4), float(
        jnp.max(jnp.abs(out - ref)))

    # Tiled path (also exercises the padded / parallel-grid branch).
    B2 = 24
    time2 = jax.random.randint(jax.random.PRNGKey(1), (B2,), 0, 1000).astype(
        jnp.float32)
    out2 = jax.block_until_ready(sinusoidal_pos_emb(time2, DIM, block_b=16))
    ref2 = jax.block_until_ready(ref_sinusoidal_pos_emb(time2, DIM))
    assert out2.shape == (B2, DIM), out2.shape
    assert jnp.allclose(out2, ref2, rtol=1e-3, atol=1e-4), float(
        jnp.max(jnp.abs(out2 - ref2)))

    print("KERNEL_OK")
</pallas_src>

<mosaic_0001>
module attributes {stable_mosaic.version = 11 : i64} {
  func.func @_sinusoidal_pos_emb_kernel(%arg0: memref<8x1xf32, #tpu.memory_space<vmem>>, %arg1: memref<2x128xf32, #tpu.memory_space<vmem>>, %arg2: memref<8x128xf32, #tpu.memory_space<vmem>>) attributes {dimension_semantics = [], scalar_prefetch = 0 : i64, scratch_operands = 0 : i64, tpu.core_type = #tpu.core_type<tc>} {
    %c0 = arith.constant 0 : index
    %c0_0 = arith.constant 0 : index
    %0 = vector.load %arg0[%c0, %c0_0] : memref<8x1xf32, #tpu.memory_space<vmem>>, vector<8x1xf32>
    %c0_1 = arith.constant 0 : index
    %c0_2 = arith.constant 0 : index
    %1 = vector.load %arg1[%c0_1, %c0_2] : memref<2x128xf32, #tpu.memory_space<vmem>>, vector<1x128xf32>
    %c1 = arith.constant 1 : index
    %c0_3 = arith.constant 0 : index
    %2 = vector.load %arg1[%c1, %c0_3] : memref<2x128xf32, #tpu.memory_space<vmem>>, vector<1x128xf32>
    %3 = vector.broadcast %0 : vector<8x1xf32> to vector<8x128xf32>
    %4 = vector.broadcast %1 : vector<1x128xf32> to vector<8x128xf32>
    %5 = arith.mulf %3, %4 : vector<8x128xf32>
    %6 = vector.broadcast %2 : vector<1x128xf32> to vector<8x128xf32>
    %7 = arith.addf %5, %6 : vector<8x128xf32>
    %8 = math.sin %7 : vector<8x128xf32>
    %c0_4 = arith.constant 0 : index
    %c0_5 = arith.constant 0 : index
    %9 = vector.load %arg2[%c0_4, %c0_5] : memref<8x128xf32, #tpu.memory_space<vmem>>, vector<8x128xf32>
    tpu.vector_store %arg2[%c0_4, %c0_5], %8 {strides = array<i32>} : memref<8x128xf32, #tpu.memory_space<vmem>>, vector<8x128xf32>,
    return
  }
}

</mosaic_0001>

<llo_original>
// kernel: tpu_custom_call.1
$region0: #{tpu_custom_call.1}
  #allocation0 [shape = 'u32[]', space=smem, size = 0x4, offset = 0x4, fixed_abs, tag = 'smem constant byte address 0x4 - core index']
  #allocation1 [shape = 'u32[144,128]{1,0:T(1,128)}', space=vmem, size = 0x12000, scoped, tag = 'internal scratch']
  %s0 = inlined_call_operand.vmem [shape: f32[8,1], index: 0, kind: input, shape index: {}]
  %s1 = inlined_call_operand.vmem [shape: f32[2,128], index: 1, kind: input, shape index: {}]
  %s2 = inlined_call_operand.hbm [shape: f32[8,128], index: 2, kind: output, shape index: {}]
  %s3 = sld [smem:[#allocation0]]
  $region18: #{tpu_custom_call.1} parent=0
    _
  %s5 = ssub.s32 1, %s3
  %s6 = scalar_select 0, %s5, %s3
  $region1: #{tpu_custom_call.1} parent=0
    #allocation2 [shape = 'u8[4096]{0}', space=vmem, size = 0x1000, scoped, tag = 'output window, operand 0, single buffered']
    #allocation3 [shape = 's32[1]{0}', space=sflag, size = 0x4, scoped, tag = 'scoped memory for tpu_custom_call.1']
    %7 = vsyncpa [#allocation3], 0
    // Predicated region
    $region2: #{tpu_custom_call.1} parent=1 // pred_check
      _
    $region3: #{tpu_custom_call.1} parent=1 // pred_check_branch
      %9 = sbr.rel (0) target = $region5
    $region4: #{tpu_custom_call.1} parent=1 // pred_region
      _
    $region5: #{tpu_custom_call.1} parent=1 // pred_fallthru
      _
    // Predicated region
    $region6: #{tpu_custom_call.1} parent=1 // pred_check
      _
    $region7: #{tpu_custom_call.1} parent=1 // pred_check_branch
      %11 = sbr.rel (0) target = $region9
    $region8: #{tpu_custom_call.1} parent=1 // pred_region
      _
    $region9: #{tpu_custom_call.1} parent=1 // pred_fallthru
      _
    %v12 = vld [vmem:[%s0] sm:$0xff]
    %v13 = vld [vmem:[%s1] sm:$0x1]
    %v14 = vld [vmem:[%s1 + $0x1] sm:$0x1]
    %16 = vset.pattern.permute.xlu0 0
    %17 = vperm.xlu0 %16, %v12
    %v18 = vpop.permute.xlu0 %17
    %v20 = vlaneseq
    %v21 = vshrl.u32 %v20, 7
    %v22 = vsub.s32 0, %v21
    %v23 = vrot.slane %v13, %v22
    %v24 = vmul.f32 %v18, %v23
    %v25 = vlaneseq
    %v26 = vshrl.u32 %v25, 7
    %v27 = vsub.s32 0, %v26
    %v28 = vrot.slane %v14, %v27
    %v29 = vadd.f32 %v24, %v28
    %v30 = vand.u32 2147483647, %v29
    %vm31 = vcmp.le.f32.partialorder %v30, 0.7853982
    %vm32 = vcmp.lt.s32.totalorder %v29, 0
    %v33 = vand.u32 %v29, 2139095040
    %v34 = vshrl.u32 %v33, 23
    %v35 = vsub.s32 %v34, 127
    %v36 = vand.u32 2147483647, %v29
    %v37 = vand.u32 %v36, 8388607
    %v38 = vor.u32 %v37, 8388608
    %v39 = vsub.s32 0, %v38
    %v40 = vadd.s32 %v35, 1
    %vm41 = vcmp.gt.s32.totalorder %v40, 0
    %v42 = vsel %vm41, %v40, 0
    %v43 = vshrl.u32 %v42, 5
    %v44 = vand.u32 %v42, 31
    %v45 = vsub.s32 32, %v44
    %v46 = vshrl.u32 683565275, %v45
    %v47 = vshll.u32 683565275, %v44
    %v48 = vshrl.u32 2475754826, %v45
    %v49 = vor.u32 %v47, %v48
    %v50 = vshll.u32 2475754826, %v44
    %v51 = vshrl.u32 2131351028, %v45
    %v52 = vor.u32 %v50, %v51
    %v53 = vshll.u32 2131351028, %v44
    %v54 = vshrl.u32 2102212464, %v45
    %v55 = vor.u32 %v53, %v54
    %v56 = vshll.u32 2102212464, %v44
    %v57 = vshrl.u32 920167782, %v45
    %v58 = vor.u32 %v56, %v57
    %v59 = vshll.u32 920167782, %v44
    %v60 = vshrl.u32 1326507024, %v45
    %v61 = vor.u32 %v59, %v60
    %vm62 = vcmp.lt.s32.totalorder %v43, 1
    %vm63 = vcmp.lt.s32.totalorder %v43, 2
    %vm64 = vcmp.lt.s32.totalorder %v43, 3
    %vm65 = vcmp.lt.s32.totalorder %v43, 4
    %v66 = vsel %vm62, %v46, %v49
    %v67 = vsel %vm65, %v55, 2102212464
    %v68 = vsel %vm64, %v52, %v67
    %v69 = vsel %vm63, %v66, %v68
    %v70 = vsel %vm62, %v49, %v52
    %v71 = vsel %vm65, %v58, 920167782
    %v72 = vsel %vm64, %v55, %v71
    %v73 = vsel %vm63, %v70, %v72
    %v74 = vsel %vm62, %v52, %v55
    %v75 = vsel %vm65, %v61, 1326507024
    %v76 = vsel %vm64, %v58, %v75
    %v77 = vsel %vm63, %v74, %v76
    %v78 = vshll.u32 %v38, 8
    %v79 = vmul.u32.u64.compose %v78, %v77
    %v80 = vextract.low.u32 %v79
    %v81 = vextract.high.u32 %v79
    %v82 = vmul.u32.u64.compose %v78, %v73
    %v83 = vextract.low.u32 %v82
    %v84 = vextract.high.u32 %v82
    %v85 = vmul.u32 %v78, %v69
    %v86 = vadd.s32 %v81, %v83
    %vm87 = vc.u32 %v81, %v83
    %v88 = vadd.s32 %v84, 1
    %v89 = vsel %vm87, %v88, %v84
    %v90 = vadd.s32 %v85, %v89
    %v91 = vadd.s32 %v90, 536870912
    %v92 = vshrl.u32 %v91, 30
    %v93 = vshll.u32 %v92, 30
    %v94 = vsub.s32 %v90, %v93
    %vm95 = vcmp.lt.s32.totalorder %v94, 0
    %v96 = vsub.s32 0, %v94
    %v97 = vsel %vm95, %v96, %v94
    %v98 = vclz %v97
    %v99 = vsub.s32 %v98, 2
    %vm100 = vcmp.gt.s32.totalorder 0, %v99
    %v101 = vsel %vm100, 0, %v99
    %v102 = vsub.s32 32, %v101
    %v103 = vshll.u32 %v94, %v101
    %v104 = vshrl.u32 %v86, %v102
    %v105 = vor.u32 %v103, %v104
    %v106 = vsub.s32 4294967266, %v101
    %v107 = vadd.s32 %v106, 127
    %v108 = vshll.u32 %v107, 23
    %v109 = vor.u32 4788187, %v108
    %v110 = vand.u32 2147483647, %v109
    %v112 = vcvt.s32.f32 %v105
    %v113 = vmul.f32 %v112, %v110
    %v114 = vxor.u32 %v113, 2147483648
    %v115 = vsel %vm32, %v114, %v113
    %v116 = vsub.s32 4, %v92
    %v117 = vsel %vm32, %v116, %v92
    %v118 = vsel %vm31, %v29, %v115
    %v119 = vsel %vm31, 0, %v117
    %v120 = vcosq.f32.pop %v118
    %v121 = vsinq.f32.pop %v118
    %vm122 = vweird.f32 %v29
    %v123 = vadd.s32 %v119, 3
    %v124 = vand.u32 %v123, 3
    %vm125 = vcmp.lt.s32.totalorder %v124, 2
    %vm126 = vcmp.eq.s32.totalorder %v124, 0
    %v127 = vxor.u32 %v121, 2147483648
    %v128 = vsel %vm126, %v120, %v127
    %vm129 = vcmp.eq.s32.totalorder %v124, 2
    %v130 = vxor.u32 %v120, 2147483648
    %v131 = vsel %vm129, %v130, %v121
    %v132 = vsel %vm125, %v128, %v131
    %v133 = vsel %vm122, nan, %v132
    %134 = vst [vmem:[#allocation2] sm:$0xff] %v133
    // Predicated region
    $region10: #{tpu_custom_call.1} parent=1 // pred_check
      _
    $region11: #{tpu_custom_call.1} parent=1 // pred_check_branch
      %136 = sbr.rel (0) target = $region13
    $region12: #{tpu_custom_call.1} parent=1 // pred_region
      %s138 = ssub.s32 128, 128
      %139 = vsyncadd [#allocation3], %s138
      %s141 = sshll.u32 [#allocation2], 4
      %s142 = int_to_ptr.vmem [resolvable:$true] %s141
      %144 = dma.vmem_to_hbm [thread:$0]  %s142, 128, %s2, [#allocation3]
    $region13: #{tpu_custom_call.1} parent=1 // pred_fallthru
      _
    // Predicated region
    $region14: #{tpu_custom_call.1} parent=1 // pred_check
      _
    $region15: #{tpu_custom_call.1} parent=1 // pred_check_branch
      %146 = sbr.rel (0) target = $region17
    $region16: #{tpu_custom_call.1} parent=1 // pred_region
      %147 = dma.done [#allocation3], 128
    $region17: #{tpu_custom_call.1} parent=1 // pred_fallthru
      _
    %148 = vsyncpa [#allocation3], 1

</llo_original>
